<compile_context>
chip_gen: v5e
topology: v5e:2x2
jax: 0.10.0
libtpu: 0.0.40
codegen_flags: <defaults>
</compile_context>

<pallas_src>
import functools

import jax
import jax.numpy as jnp
from jax.experimental import pallas as pl
from jax.experimental.pallas import tpu as pltpu

_H1, _H2 = 64, 32   # hidden widths of fc1 / fc2


def _round_up(x, m):
    return (x + m - 1) // m * m


# ---------------------------------------------------------------------------
# Kernel
# ---------------------------------------------------------------------------
def critic_kernel(x_ref, w1_ref, w2_ref, b2_ref, w3_ref, b3_ref, o_ref):
    # x_ref : [S_pad, TB]  (row S is all-ones -> fc1 bias folded into w1)
    # w1_ref: [64, S_pad]  (column S holds b1)
    h1 = jnp.dot(w1_ref[...], x_ref[...],
                 preferred_element_type=jnp.float32)           # [64, TB] f32
    h1 = jnp.maximum(h1, 0.0)

    h2 = jnp.dot(w2_ref[...], h1,
                 preferred_element_type=jnp.float32) + b2_ref[...]  # [32, TB]
    h2 = jnp.maximum(h2, 0.0)

    # Final 32 -> 1 layer on the VPU/XLU (avoid an M=1 MXU push/pop).
    o_ref[...] = (jnp.sum(h2 * w3_ref[...], axis=0, keepdims=True)
                  + b3_ref[0, 0])                              # [1, TB]


# ---------------------------------------------------------------------------
# Parameter packing (done ONCE per optimizer update, outside the forward)
# ---------------------------------------------------------------------------
def pack_params(params, state_dim, dtype=jnp.bfloat16):
    """PyTorch [out, in] weights -> pre-shaped kernel operands."""
    s_pad = _round_up(state_dim + 1, 8)          # room for the folded bias row
    w1p = jnp.zeros((_H1, s_pad), jnp.float32)
    w1p = w1p.at[:, :state_dim].set(params["w1"])
    w1p = w1p.at[:, state_dim].set(params["b1"])   # bias -> extra column
    w1p = w1p.astype(dtype)                         # bf16 by default
    w2 = params["w2"].astype(jnp.float32)                       # [32, 64]
    b2 = params["b2"].reshape(_H2, 1).astype(jnp.float32)       # [32, 1]
    w3 = params["w3"].reshape(_H2, 1).astype(jnp.float32)       # [32, 1]
    b3 = params["b3"].reshape(1, 1).astype(jnp.float32)         # (1,1) SMEM
    return (w1p, w2, b2, w3, b3)


# ---------------------------------------------------------------------------
# Tile selection: grid=(1,) on single-TC chips, exactly 2 parallel steps on
# dual-TC chips (v7x), stream in block_b tiles only for very large batches.
# ---------------------------------------------------------------------------
def _tiles(B, block_b, num_cores):
    b128 = _round_up(B, 128)
    if b128 <= block_b * max(num_cores, 1):
        if num_cores >= 2 and b128 >= 256:
            tb = _round_up(-(-b128 // num_cores), 128)   # 2 parallel steps
        else:
            tb = b128                                    # single grid step
    else:
        tb = block_b
    b_pad = _round_up(b128, tb)
    return tb, b_pad


def _default_num_cores():
    try:
        kind = jax.devices()[0].device_kind.lower()
    except Exception:
        return 1
    return 2 if "v7" in kind else 1          # v7x: 2 TensorCores / chip


# ---------------------------------------------------------------------------
# Jitted forward (packing hoisted out)
# ---------------------------------------------------------------------------
@functools.partial(jax.jit, static_argnames=("block_b", "num_cores"))
def critic_forward_packed(x, packed, *, block_b=2048, num_cores=1):
    """x: [B, state_dim]; packed = pack_params(...) -> [B, 1] float32."""
    w1p, w2, b2, w3, b3 = packed
    B, S = x.shape
    s_pad = w1p.shape[1]
    assert S + 1 <= s_pad, "packed params do not match state_dim"

    tb, b_pad = _tiles(B, block_b, num_cores)
    grid = (b_pad // tb,)
    dtype = w1p.dtype

    # Feature-major, sublane-padded, lane-dense input; row S = 1.0 (fc1 bias).
    # Under jit this pad/transpose fuses into a single producer fusion.
    x_t = jnp.zeros((s_pad, b_pad), dtype)
    x_t = x_t.at[:S, :B].set(x.T.astype(dtype))
    x_t = x_t.at[S, :].set(1.0)

    flops = 2 * b_pad * (s_pad * _H1 + _H1 * _H2 + _H2)
    bytes_accessed = (x_t.size * x_t.dtype.itemsize
                      + 4 * b_pad
                      + sum(p.size * p.dtype.itemsize for p in packed))

    out_t = pl.pallas_call(
        critic_kernel,
        out_shape=jax.ShapeDtypeStruct((1, b_pad), jnp.float32),
        grid=grid,
        in_specs=[
            pl.BlockSpec((s_pad, tb), lambda i: (0, i)),     # x tile, streamed
            pl.BlockSpec((_H1, s_pad), lambda i: (0, 0)),    # w1 (+b1), resident
            pl.BlockSpec((_H2, _H1), lambda i: (0, 0)),      # w2, resident
            pl.BlockSpec((_H2, 1), lambda i: (0, 0)),        # b2, resident
            pl.BlockSpec((_H2, 1), lambda i: (0, 0)),        # w3, resident
            pl.BlockSpec(memory_space=pltpu.MemorySpace.SMEM),  # b3 scalar
        ],
        out_specs=pl.BlockSpec((1, tb), lambda i: (0, i)),   # lane-dense output
        compiler_params=pltpu.CompilerParams(
            dimension_semantics=("parallel",)),              # v7x 2-TC sharding
        cost_estimate=pl.CostEstimate(
            flops=flops, transcendentals=0, bytes_accessed=bytes_accessed),
    )(x_t, w1p, w2, b2, w3, b3)

    return out_t[0, :B].reshape(B, 1)


def critic_forward(x, params, *, block_b=2048, num_cores=None,
                   dtype=jnp.bfloat16):
    """Convenience wrapper: packs params each call (prefer hoisting)."""
    if num_cores is None:
        num_cores = _default_num_cores()
    packed = pack_params(params, x.shape[1], dtype=dtype)
    return critic_forward_packed(x, packed, block_b=block_b,
                                 num_cores=num_cores)


# ---------------------------------------------------------------------------
# Init / reference
# ---------------------------------------------------------------------------
def init_params(key, state_dim):
    """PyTorch nn.Linear default init: U(-1/sqrt(fan_in), +1/sqrt(fan_in))."""
    dims = [(state_dim, _H1), (_H1, _H2), (_H2, 1)]
    params = {}
    for i, (fan_in, fan_out) in enumerate(dims, start=1):
        key, kw, kb = jax.random.split(key, 3)
        bound = 1.0 / jnp.sqrt(jnp.float32(fan_in))
        params[f"w{i}"] = jax.random.uniform(
            kw, (fan_out, fan_in), jnp.float32, -bound, bound)
        params[f"b{i}"] = jax.random.uniform(
            kb, (fan_out,), jnp.float32, -bound, bound)
    return params


def critic_reference(x, params):
    h = jnp.maximum(x @ params["w1"].T + params["b1"], 0.0)
    h = jnp.maximum(h @ params["w2"].T + params["b2"], 0.0)
    return h @ params["w3"].T + params["b3"]


if __name__ == "__main__":
    key = jax.random.PRNGKey(0)
    state_dim = 4   # CartPole observation dim
    params = init_params(key, state_dim)
    num_cores = _default_num_cores()

    # Pack ONCE (per optimizer update in real A2C) and reuse across forwards.
    packed_f32 = pack_params(params, state_dim, dtype=jnp.float32)
    packed_bf16 = pack_params(params, state_dim, dtype=jnp.bfloat16)

    # Small smoke test, f32 path (single grid step), tight tolerance.
    key, kx = jax.random.split(key)
    x_small = jax.random.normal(kx, (8, state_dim), jnp.float32)
    out_small = jax.block_until_ready(
        critic_forward_packed(x_small, packed_f32, num_cores=num_cores))
    ref_small = critic_reference(x_small, params)
    assert out_small.shape == (8, 1)
    assert jnp.allclose(out_small, ref_small, atol=1e-4, rtol=1e-4)

    # Ragged batch, bf16 path (default), grid=1 on 1-TC / 2 steps on v7x.
    key, kx = jax.random.split(key)
    x_big = jax.random.normal(kx, (300, state_dim), jnp.float32)
    out_big = jax.block_until_ready(
        critic_forward_packed(x_big, packed_bf16, num_cores=num_cores))
    ref_big = critic_reference(x_big, params)
    assert out_big.shape == (300, 1)
    assert jnp.allclose(out_big, ref_big, atol=2e-2, rtol=2e-2)

    # Force a multi-step streamed grid (exercises batch tiling + padded tail).
    out_stream = jax.block_until_ready(
        critic_forward_packed(x_big, packed_f32, block_b=128, num_cores=1))
    assert jnp.allclose(out_stream, ref_big, atol=1e-4, rtol=1e-4)

    print("KERNEL_OK")
</pallas_src>

<mosaic_0001>
module attributes {stable_mosaic.version = 11 : i64} {
  func.func @critic_kernel(%arg0: i32, %arg1: memref<8x128xf32, #tpu.memory_space<vmem>>, %arg2: memref<64x8xf32, #tpu.memory_space<vmem>>, %arg3: memref<32x64xf32, #tpu.memory_space<vmem>>, %arg4: memref<32x1xf32, #tpu.memory_space<vmem>>, %arg5: memref<32x1xf32, #tpu.memory_space<vmem>>, %arg6: memref<1x1xf32, #tpu.memory_space<smem>>, %arg7: memref<1x128xf32, #tpu.memory_space<vmem>>) attributes {dimension_semantics = [#tpu.dimension_semantics<parallel>], iteration_bounds = array<i64: 1>, scalar_prefetch = 0 : i64, scratch_operands = 0 : i64, tpu.core_type = #tpu.core_type<tc>, window_params = [{transform_indices = @transform_0, window_bounds = array<i64: 8, 128>}, {pipeline_mode = #tpu.pipeline_mode<synchronous>, transform_indices = @transform_1, window_bounds = array<i64: 64, 8>}, {pipeline_mode = #tpu.pipeline_mode<synchronous>, transform_indices = @transform_2, window_bounds = array<i64: 32, 64>}, {pipeline_mode = #tpu.pipeline_mode<synchronous>, transform_indices = @transform_3, window_bounds = array<i64: 32, 1>}, {pipeline_mode = #tpu.pipeline_mode<synchronous>, transform_indices = @transform_4, window_bounds = array<i64: 32, 1>}, {transform_indices = @transform_5, window_bounds = array<i64: 1, 1>}, {transform_indices = @transform_6, window_bounds = array<i64: 1, 128>}]} {
    %c0 = arith.constant 0 : index
    %c0_0 = arith.constant 0 : index
    %0 = vector.load %arg2[%c0, %c0_0] : memref<64x8xf32, #tpu.memory_space<vmem>>, vector<64x8xf32>
    %c0_1 = arith.constant 0 : index
    %c0_2 = arith.constant 0 : index
    %1 = vector.load %arg1[%c0_1, %c0_2] : memref<8x128xf32, #tpu.memory_space<vmem>>, vector<8x128xf32>
    %cst = arith.constant dense<0.000000e+00> : vector<64x128xf32>
    %2 = tpu.matmul %0, %1, %cst {dimension_numbers = #tpu.dot_dimension_numbers<[1], [0], [0], [1], [0, 0, 1, 1], [], []>} : vector<64x8xf32>, vector<8x128xf32>, vector<64x128xf32> -> vector<64x128xf32>
    %cst_3 = arith.constant 0.000000e+00 : f32
    %3 = vector.broadcast %cst_3 : f32 to vector<64x128xf32>
    %4 = arith.maximumf %2, %3 : vector<64x128xf32>
    %c0_4 = arith.constant 0 : index
    %c0_5 = arith.constant 0 : index
    %5 = vector.load %arg3[%c0_4, %c0_5] : memref<32x64xf32, #tpu.memory_space<vmem>>, vector<32x64xf32>
    %cst_6 = arith.constant dense<0.000000e+00> : vector<32x128xf32>
    %6 = tpu.matmul %5, %4, %cst_6 {dimension_numbers = #tpu.dot_dimension_numbers<[1], [0], [0], [1], [0, 0, 1, 1], [], []>} : vector<32x64xf32>, vector<64x128xf32>, vector<32x128xf32> -> vector<32x128xf32>
    %c0_7 = arith.constant 0 : index
    %c0_8 = arith.constant 0 : index
    %7 = vector.load %arg4[%c0_7, %c0_8] : memref<32x1xf32, #tpu.memory_space<vmem>>, vector<32x1xf32>
    %8 = vector.broadcast %7 : vector<32x1xf32> to vector<32x128xf32>
    %9 = arith.addf %6, %8 : vector<32x128xf32>
    %cst_9 = arith.constant 0.000000e+00 : f32
    %10 = vector.broadcast %cst_9 : f32 to vector<32x128xf32>
    %11 = arith.maximumf %9, %10 : vector<32x128xf32>
    %c0_10 = arith.constant 0 : index
    %c0_11 = arith.constant 0 : index
    %12 = vector.load %arg5[%c0_10, %c0_11] : memref<32x1xf32, #tpu.memory_space<vmem>>, vector<32x1xf32>
    %13 = vector.broadcast %12 : vector<32x1xf32> to vector<32x128xf32>
    %14 = arith.mulf %11, %13 : vector<32x128xf32>
    %cst_12 = arith.constant dense<0.000000e+00> : vector<128xf32>
    %15 = vector.multi_reduction <add>, %14, %cst_12 [0] : vector<32x128xf32> to vector<128xf32>
    %16 = vector.shape_cast %15 : vector<128xf32> to vector<1x128xf32>
    %c0_13 = arith.constant 0 : index
    %c0_14 = arith.constant 0 : index
    %17 = memref.load %arg6[%c0_13, %c0_14] : memref<1x1xf32, #tpu.memory_space<smem>>
    %18 = vector.broadcast %17 : f32 to vector<1x128xf32>
    %19 = arith.addf %16, %18 : vector<1x128xf32>
    %c0_15 = arith.constant 0 : index
    %c0_16 = arith.constant 0 : index
    %20 = vector.load %arg7[%c0_15, %c0_16] : memref<1x128xf32, #tpu.memory_space<vmem>>, vector<1x128xf32>
    tpu.vector_store %arg7[%c0_15, %c0_16], %19 {strides = array<i32>} : memref<1x128xf32, #tpu.memory_space<vmem>>, vector<1x128xf32>,
    return
  }
  func.func @transform_0(%arg0: i32) -> (i32, i32) {
    %c0_i32 = arith.constant 0 : i32
    %c0_i32_0 = arith.constant 0 : i32
    return %c0_i32, %arg0 : i32, i32
  }
  func.func @transform_1(%arg0: i32) -> (i32, i32) {
    %c0_i32 = arith.constant 0 : i32
    %c0_i32_0 = arith.constant 0 : i32
    %c0_i32_1 = arith.constant 0 : i32
    return %c0_i32, %c0_i32_0 : i32, i32
  }
  func.func @transform_2(%arg0: i32) -> (i32, i32) {
    %c0_i32 = arith.constant 0 : i32
    %c0_i32_0 = arith.constant 0 : i32
    %c0_i32_1 = arith.constant 0 : i32
    return %c0_i32, %c0_i32_0 : i32, i32
  }
  func.func @transform_3(%arg0: i32) -> (i32, i32) {
    %c0_i32 = arith.constant 0 : i32
    %c0_i32_0 = arith.constant 0 : i32
    %c0_i32_1 = arith.constant 0 : i32
    return %c0_i32, %c0_i32_0 : i32, i32
  }
  func.func @transform_4(%arg0: i32) -> (i32, i32) {
    %c0_i32 = arith.constant 0 : i32
    %c0_i32_0 = arith.constant 0 : i32
    %c0_i32_1 = arith.constant 0 : i32
    return %c0_i32, %c0_i32_0 : i32, i32
  }
  func.func @transform_5(%arg0: i32) -> (i32, i32) {
    %c0_i32 = arith.constant 0 : i32
    %c0_i32_0 = arith.constant 0 : i32
    %c0_i32_1 = arith.constant 0 : i32
    return %c0_i32, %c0_i32_0 : i32, i32
  }
  func.func @transform_6(%arg0: i32) -> (i32, i32) {
    %c0_i32 = arith.constant 0 : i32
    %c0_i32_0 = arith.constant 0 : i32
    return %c0_i32, %arg0 : i32, i32
  }
}

</mosaic_0001>

<llo_original>
// kernel: critic_forward_packed.1
$region0: #{critic_forward_packed.1}
  #allocation0 [shape = 'u32[]', space=smem, size = 0x4, offset = 0x4, fixed_abs, tag = 'smem constant byte address 0x4 - core index']
  #allocation1 [shape = 'u32[72,128]{1,0:T(1,128)}', space=vmem, size = 0x9000, scoped, tag = 'internal scratch']
  #allocation2 [shape = 'f32[1,1]{1,0:T(1,128)S(6)}', space=smem, size = 0x200, scoped, tag = 'scoped memory for critic_forward_packed.1']
  %s0 = inlined_call_operand.vmem [shape: f32[8,128], index: 0, kind: input, shape index: {}]
  %s1 = inlined_call_operand.vmem [shape: f32[64,8], index: 1, kind: input, shape index: {}]
  %s2 = inlined_call_operand.vmem [shape: f32[32,64], index: 2, kind: input, shape index: {}]
  %s3 = inlined_call_operand.vmem [shape: f32[32,1], index: 3, kind: input, shape index: {}]
  %s4 = inlined_call_operand.vmem [shape: f32[32,1], index: 4, kind: input, shape index: {}]
  %s5 = inlined_call_operand.<no memory space> [shape: f32[1,1], index: 5, kind: input, shape index: {}]
  %s6 = inlined_call_operand.vmem [shape: f32[1,128], index: 6, kind: output, shape index: {}]
  %s7 = sld [smem:[#allocation0]]
  $region34: #{critic_forward_packed.1} parent=0
    _
  %s9 = ssub.s32 1, %s7
  %s10 = scalar_select 0, %s9, %s7
  %11 = sst [smem:[#allocation2]] %s5
  // Predicated region
  $region2: #{critic_forward_packed.1} parent=0 // pred_check
    _
  $region3: #{critic_forward_packed.1} parent=0 // pred_check_branch
    %13 = sbr.rel (0) target = $region5
  $region4: #{critic_forward_packed.1} parent=0 // pred_region
    _
  $region5: #{critic_forward_packed.1} parent=0 // pred_fallthru
    _
  // Predicated region
  $region6: #{critic_forward_packed.1} parent=0 // pred_check
    _
  $region7: #{critic_forward_packed.1} parent=0 // pred_check_branch
    %15 = sbr.rel (0) target = $region9
  $region8: #{critic_forward_packed.1} parent=0 // pred_region
    _
  $region9: #{critic_forward_packed.1} parent=0 // pred_fallthru
    _
  // Predicated region
  $region10: #{critic_forward_packed.1} parent=0 // pred_check
    _
  $region11: #{critic_forward_packed.1} parent=0 // pred_check_branch
    %17 = sbr.rel (0) target = $region13
  $region12: #{critic_forward_packed.1} parent=0 // pred_region
    _
  $region13: #{critic_forward_packed.1} parent=0 // pred_fallthru
    _
  // Predicated region
  $region14: #{critic_forward_packed.1} parent=0 // pred_check
    _
  $region15: #{critic_forward_packed.1} parent=0 // pred_check_branch
    %19 = sbr.rel (0) target = $region17
  $region16: #{critic_forward_packed.1} parent=0 // pred_region
    _
  $region17: #{critic_forward_packed.1} parent=0 // pred_fallthru
    _
  // Predicated region
  $region18: #{critic_forward_packed.1} parent=0 // pred_check
    _
  $region19: #{critic_forward_packed.1} parent=0 // pred_check_branch
    %21 = sbr.rel (0) target = $region21
  $region20: #{critic_forward_packed.1} parent=0 // pred_region
    _
  $region21: #{critic_forward_packed.1} parent=0 // pred_fallthru
    _
  // Predicated region
  $region22: #{critic_forward_packed.1} parent=0 // pred_check
    _
  $region23: #{critic_forward_packed.1} parent=0 // pred_check_branch
    %23 = sbr.rel (0) target = $region25
  $region24: #{critic_forward_packed.1} parent=0 // pred_region
    _
  $region25: #{critic_forward_packed.1} parent=0 // pred_fallthru
    _
  %v24 = vld [vmem:[%s1] sm:$0xff]
  %v25 = vld [vmem:[%s1 + $0x8] sm:$0xff]
  %v26 = vld [vmem:[%s1 + $0x10] sm:$0xff]
  %v27 = vld [vmem:[%s1 + $0x18] sm:$0xff]
  %v28 = vld [vmem:[%s1 + $0x20] sm:$0xff]
  %v29 = vld [vmem:[%s1 + $0x28] sm:$0xff]
  %v30 = vld [vmem:[%s1 + $0x30] sm:$0xff]
  %v31 = vld [vmem:[%s1 + $0x38] sm:$0xff]
  %v32 = vld [vmem:[%s0] sm:$0xff]
  %vm33 = vcmask 64512
  %v35 = vsel %vm33, %v24, 0
  %v38 = vsel %vm33, %v25, 0
  %v41 = vsel %vm33, %v26, 0
  %v44 = vsel %vm33, %v27, 0
  %v47 = vsel %vm33, %v28, 0
  %v50 = vsel %vm33, %v29, 0
  %v53 = vsel %vm33, %v30, 0
  %v56 = vsel %vm33, %v31, 0
  %58 = vmatpush.msra.mxu0 0.0
  %59 = vmatpush.msra.mxu0 0.0
  %60 = vmatpush.msra.mxu0 0.0
  %61 = vmatpush.msra.mxu0 0.0
  %62 = vmatpush.msra.mxu0 0.0
  %63 = vmatpush.msra.mxu0 0.0
  %64 = vmatpush.msra.mxu0 0.0
  %65 = vmatpush.msra.mxu0 0.0
  %66 = vmatpush.msra.mxu0 0.0
  %67 = vmatpush.msra.mxu0 0.0
  %68 = vmatpush.msra.mxu0 0.0
  %69 = vmatpush.msra.mxu0 0.0
  %70 = vmatpush.msra.mxu0 0.0
  %71 = vmatpush.msra.mxu0 0.0
  %72 = vmatpush.msra.mxu0 0.0
  %73 = vmatpush.msra.mxu0 %v32
  %74 = vmatmul.f32.gmra.mxu0 %v35
  %v75 = vpop.f32.mrf.mxu0
  %v76 = vadd.f32 0.0, %v75
  %77 = vmatmul.f32.gmra.mxu0 %v38
  %v78 = vpop.f32.mrf.mxu0
  %v79 = vadd.f32 0.0, %v78
  %80 = vmatmul.f32.gmra.mxu0 %v41
  %v81 = vpop.f32.mrf.mxu0
  %v82 = vadd.f32 0.0, %v81
  %83 = vmatmul.f32.gmra.mxu0 %v44
  %v84 = vpop.f32.mrf.mxu0
  %v85 = vadd.f32 0.0, %v84
  %86 = vmatmul.f32.gmra.mxu0 %v47
  %v87 = vpop.f32.mrf.mxu0
  %v88 = vadd.f32 0.0, %v87
  %89 = vmatmul.f32.gmra.mxu0 %v50
  %v90 = vpop.f32.mrf.mxu0
  %v91 = vadd.f32 0.0, %v90
  %92 = vmatmul.f32.gmra.mxu0 %v53
  %v93 = vpop.f32.mrf.mxu0
  %v94 = vadd.f32 0.0, %v93
  %95 = vmatmul.f32.gmra.mxu0 %v56
  %v96 = vpop.f32.mrf.mxu0
  %v97 = vadd.f32 0.0, %v96
  %98 = vdwg.mxu0
  %v99 = vmax.f32 %v76, 0.0
  %v100 = vmax.f32 %v79, 0.0
  %v101 = vmax.f32 %v82, 0.0
  %v102 = vmax.f32 %v85, 0.0
  %v103 = vmax.f32 %v88, 0.0
  %v104 = vmax.f32 %v91, 0.0
  %v105 = vmax.f32 %v94, 0.0
  %v106 = vmax.f32 %v97, 0.0
  %v107 = vld [vmem:[%s2] sm:$0xff]
  %v108 = vld [vmem:[%s2 + $0x8] sm:$0xff]
  %v109 = vld [vmem:[%s2 + $0x10] sm:$0xff]
  %v110 = vld [vmem:[%s2 + $0x18] sm:$0xff]
  %v111 = vld [vmem:[%s3] sm:$0xff]
  %v112 = vld [vmem:[%s3 + $0x8] sm:$0xff]
  %v113 = vld [vmem:[%s3 + $0x10] sm:$0xff]
  %v114 = vld [vmem:[%s3 + $0x18] sm:$0xff]
  %116 = vset.pattern.permute.xlu0 0
  %117 = vperm.xlu0 %116, %v111
  %v118 = vpop.permute.xlu0 %117
  %121 = vset.pattern.permute.xlu0 0
  %122 = vperm.xlu0 %121, %v112
  %v123 = vpop.permute.xlu0 %122
  %126 = vset.pattern.permute.xlu0 0
  %127 = vperm.xlu0 %126, %v113
  %v128 = vpop.permute.xlu0 %127
  %131 = vset.pattern.permute.xlu0 0
  %132 = vperm.xlu0 %131, %v114
  %v133 = vpop.permute.xlu0 %132
  %vm135 = vcmask 523264
  %v137 = vsel %vm135, %v107, 0
  %v140 = vsel %vm135, %v108, 0
  %v143 = vsel %vm135, %v109, 0
  %v146 = vsel %vm135, %v110, 0
  %148 = vmatpush.msra.mxu0 0.0
  %149 = vmatpush.msra.mxu0 0.0
  %150 = vmatpush.msra.mxu0 0.0
  %151 = vmatpush.msra.mxu0 0.0
  %152 = vmatpush.msra.mxu0 0.0
  %153 = vmatpush.msra.mxu0 0.0
  %154 = vmatpush.msra.mxu0 0.0
  %155 = vmatpush.msra.mxu0 0.0
  %156 = vmatpush.msra.mxu0 %v106
  %157 = vmatpush.msra.mxu0 %v105
  %158 = vmatpush.msra.mxu0 %v104
  %159 = vmatpush.msra.mxu0 %v103
  %160 = vmatpush.msra.mxu0 %v102
  %161 = vmatpush.msra.mxu0 %v101
  %162 = vmatpush.msra.mxu0 %v100
  %163 = vmatpush.msra.mxu0 %v99
  %164 = vmatmul.f32.gmra.mxu0 %v137
  %v165 = vpop.f32.mrf.mxu0
  %v166 = vadd.f32 %v118, %v165
  %167 = vmatmul.f32.gmra.mxu0 %v140
  %v168 = vpop.f32.mrf.mxu0
  %v169 = vadd.f32 %v123, %v168
  %170 = vmatmul.f32.gmra.mxu0 %v143
  %v171 = vpop.f32.mrf.mxu0
  %v172 = vadd.f32 %v128, %v171
  %173 = vmatmul.f32.gmra.mxu0 %v146
  %v174 = vpop.f32.mrf.mxu0
  %v175 = vadd.f32 %v133, %v174
  %176 = vdwg.mxu0
  %v177 = vmax.f32 %v166, 0.0
  %v178 = vmax.f32 %v169, 0.0
  %v179 = vmax.f32 %v172, 0.0
  %v180 = vmax.f32 %v175, 0.0
  %v181 = vld [vmem:[%s4] sm:$0xff]
  %v182 = vld [vmem:[%s4 + $0x8] sm:$0xff]
  %v183 = vld [vmem:[%s4 + $0x10] sm:$0xff]
  %v184 = vld [vmem:[%s4 + $0x18] sm:$0xff]
  %186 = vset.pattern.permute.xlu0 0
  %187 = vperm.xlu0 %186, %v181
  %v188 = vpop.permute.xlu0 %187
  %191 = vset.pattern.permute.xlu0 0
  %192 = vperm.xlu0 %191, %v182
  %v193 = vpop.permute.xlu0 %192
  %196 = vset.pattern.permute.xlu0 0
  %197 = vperm.xlu0 %196, %v183
  %v198 = vpop.permute.xlu0 %197
  %201 = vset.pattern.permute.xlu0 0
  %202 = vperm.xlu0 %201, %v184
  %v203 = vpop.permute.xlu0 %202
  %v205 = vmul.f32 %v177, %v188
  %v206 = vmul.f32 %v178, %v193
  %v207 = vmul.f32 %v179, %v198
  %v208 = vmul.f32 %v180, %v203
  %v209 = vadd.f32 %v205, %v206
  %v210 = vadd.f32 %v209, %v207
  %v211 = vadd.f32 %v210, %v208
  %v212 = vrot.slane %v211, 4
  %v213 = vadd.f32 %v211, %v212
  %v214 = vrot.slane %v213, 2
  %v215 = vadd.f32 %v213, %v214
  %v216 = vrot.slane %v215, 1
  %v217 = vadd.f32 %v215, %v216
  %s218 = sld [smem:[#allocation2]]
  %v219 = vstv %s218
  %v220 = vadd.f32 %v217, %v219
  %221 = vst [vmem:[%s6] sm:$0x1] %v220
  // Predicated region
  $region26: #{critic_forward_packed.1} parent=0 // pred_check
    _
  $region27: #{critic_forward_packed.1} parent=0 // pred_check_branch
    %223 = sbr.rel (0) target = $region29
  $region28: #{critic_forward_packed.1} parent=0 // pred_region
    _
  $region29: #{critic_forward_packed.1} parent=0 // pred_fallthru
    _
  // Predicated region
  $region30: #{critic_forward_packed.1} parent=0 // pred_check
    _
  $region31: #{critic_forward_packed.1} parent=0 // pred_check_branch
    %225 = sbr.rel (0) target = $region33
  $region32: #{critic_forward_packed.1} parent=0 // pred_region
    _
  $region33: #{critic_forward_packed.1} parent=0 // pred_fallthru
    _

</llo_original>
